<compile_context>
chip_gen: v7x
topology: tpu7x:2x2x1
jax: 0.10.0
libtpu: 0.0.40
codegen_flags: <defaults>
</compile_context>

<pallas_src>
import functools

import jax
import jax.numpy as jnp
from jax import lax
from jax.experimental import pallas as pl
from jax.experimental.pallas import tpu as pltpu

_LANE = 128
_NEG = float(jnp.finfo(jnp.float32).min)


# ----------------------------------------------------------------------------
# Pallas kernel
# ----------------------------------------------------------------------------
def _channel_attention_kernel(x_ref, w1_ref, w2_ref, out_ref, max_acc, sum_acc,
                              *, total_s, tile_s, inv_s, need_mask):
    """One grid step streams a (N, C, tile_s) spatial slab of the input.

    max_acc / sum_acc are lane-resident (N, C, 128) f32 VMEM accumulators that
    persist across the (single, "arbitrary") grid axis.  The final XLU reduce,
    the SE MLP and the sigmoid run once at the last grid step.
    """
    N, C = out_ref.shape
    t = pl.program_id(0)
    nt = pl.num_programs(0)
    strips = tile_s // _LANE

    @pl.when(t == 0)
    def _():
        max_acc[...] = jnp.full(max_acc.shape, _NEG, dtype=max_acc.dtype)
        sum_acc[...] = jnp.zeros(sum_acc.shape, dtype=sum_acc.dtype)

    if need_mask:
        lane_idx = lax.broadcasted_iota(jnp.int32, (1, 1, _LANE), 2)

    def strip_fn(k):
        off = pl.multiple_of(k * _LANE, _LANE)
        strip = x_ref[:, :, pl.ds(off, _LANE)].astype(jnp.float32)  # (N, C, 128)
        if need_mask:
            valid = (t * tile_s + k * _LANE + lane_idx) < total_s
            return jnp.where(valid, strip, _NEG), jnp.where(valid, strip, 0.0)
        return strip, strip

    def body(k, carry):
        m, s = carry
        sm, ss = strip_fn(k)
        return jnp.maximum(m, sm), s + ss

    init = (jnp.full((N, C, _LANE), _NEG, jnp.float32),
            jnp.zeros((N, C, _LANE), jnp.float32))
    m_t, s_t = lax.fori_loop(0, strips, body, init,
                             unroll=True if strips <= 8 else 8)

    # full-ref VPU updates (no masked sub-vreg stores)
    max_acc[...] = jnp.maximum(max_acc[...], m_t)
    sum_acc[...] = sum_acc[...] + s_t

    @pl.when(t == nt - 1)
    def _():
        mx = jnp.max(max_acc[...], axis=-1)              # (N, C) single XLU reduce
        av = jnp.sum(sum_acc[...], axis=-1) * inv_s      # (N, C) mean
        pooled = jnp.concatenate([mx, av], axis=0)       # (2N, C): [max; avg]
        # shared SE MLP (1x1 convs, no bias) batched over both pools & samples
        h = jnp.maximum(
            jnp.dot(pooled, w1_ref[...], preferred_element_type=jnp.float32), 0.0)
        se = jnp.dot(h, w2_ref[...], preferred_element_type=jnp.float32)  # (2N, C)
        logits = se[0:N, :] + se[N:2 * N, :]             # se(max) + se(avg)
        # sigmoid(x) = 0.5 * (tanh(x/2) + 1)  -- overflow-safe, EUP tanh
        out_ref[...] = (0.5 * (jnp.tanh(0.5 * logits) + 1.0)).astype(out_ref.dtype)


# ----------------------------------------------------------------------------
# Wrapper
# ----------------------------------------------------------------------------
def channel_attention_pallas(x_nchw, w1, w2, *, tile_s=None):
    """x_nchw: (N, C, H, W); w1: (C, C//r); w2: (C//r, C).  Returns (N, C, 1, 1)."""
    N, C, H, W = x_nchw.shape
    S = H * W
    Cr = w1.shape[1]
    assert w1.shape == (C, Cr) and w2.shape == (Cr, C)

    # Lane-dense view in the NATIVE dtype: spatial on lanes, no HBM f32 copy.
    x = x_nchw.reshape(N, C, S)
    itemsize = jnp.dtype(x.dtype).itemsize
    w1 = w1.astype(jnp.float32)
    w2 = w2.astype(jnp.float32)

    # ---- VMEM-budgeted, generation-aware tile selection ----
    try:
        phys_vmem = int(pltpu.get_tpu_info().vmem_capacity_bytes)
    except Exception:
        phys_vmem = 64 << 20                       # v7x-safe conservative default
    vmem_limit = min(int(phys_vmem * 0.8), 100 << 20)

    # tile-independent VMEM: weights + two lane-resident accumulators + output
    fixed = 4 * (2 * C * Cr) + 2 * 4 * (N * C * _LANE) + 4 * N * C
    per_s = 2 * N * C * itemsize                   # double-buffered bytes / spatial elem
    budget = max(vmem_limit - fixed - (4 << 20), per_s * _LANE)
    s_ceil = _LANE * pl.cdiv(S, _LANE)

    if tile_s is None:
        tile_s = min((budget // per_s) // _LANE * _LANE, s_ceil)
        tile_s = max(tile_s, _LANE)
    assert tile_s % _LANE == 0, "tile_s must be a multiple of 128"

    grid = (pl.cdiv(S, tile_s),)
    need_mask = (S % tile_s) != 0                  # masked tail tile in-kernel

    vmem_limit = min(int(phys_vmem * 0.85),
                     max(vmem_limit, per_s * tile_s + fixed + (8 << 20)))

    kernel = functools.partial(
        _channel_attention_kernel,
        total_s=S, tile_s=tile_s, inv_s=1.0 / S, need_mask=need_mask)

    out = pl.pallas_call(
        kernel,
        out_shape=jax.ShapeDtypeStruct((N, C), x.dtype),
        grid=grid,
        in_specs=[
            pl.BlockSpec((N, C, tile_s), lambda t: (0, 0, t)),   # spatial-tiled input
            pl.BlockSpec((C, Cr), lambda t: (0, 0)),             # SE conv1 weight
            pl.BlockSpec((Cr, C), lambda t: (0, 0)),             # SE conv2 weight
        ],
        out_specs=pl.BlockSpec((N, C), lambda t: (0, 0)),        # resident output
        scratch_shapes=[pltpu.VMEM((N, C, _LANE), jnp.float32),  # running max
                        pltpu.VMEM((N, C, _LANE), jnp.float32)], # running sum
        compiler_params=pltpu.CompilerParams(
            dimension_semantics=("arbitrary",),                  # reduction axis
            vmem_limit_bytes=int(vmem_limit)),
    )(x, w1, w2)

    return out.reshape(N, C, 1, 1)


# ----------------------------------------------------------------------------
# Pure-JAX reference (matches the PyTorch module in eval mode)
# ----------------------------------------------------------------------------
def channel_attention_ref(x, w1, w2):
    mx = jnp.max(x, axis=(2, 3))                   # (N, C)
    av = jnp.mean(x, axis=(2, 3))                  # (N, C)

    def se(v):
        return jnp.maximum(v @ w1, 0.0) @ w2

    out = jax.nn.sigmoid(se(mx) + se(av))
    return out.reshape(x.shape[0], x.shape[1], 1, 1)


# ----------------------------------------------------------------------------
if __name__ == "__main__":
    key = jax.random.PRNGKey(0)
    k0, k1, k2, k3 = jax.random.split(key, 4)

    # --- test 1: f32, S = 256, forced tile_s=128 -> grid=(2,), exercises
    #             init / accumulate / finalize branches across the grid.
    N, C, reduction = 2, 16, 8
    H = W = 16
    Cr = C // reduction
    x = jax.random.normal(k0, (N, C, H, W), dtype=jnp.float32)
    w1 = jax.random.normal(k1, (C, Cr), dtype=jnp.float32) * jnp.sqrt(2.0 / Cr)
    w2 = jax.random.normal(k2, (Cr, C), dtype=jnp.float32) * jnp.sqrt(2.0 / C)

    out = channel_attention_pallas(x, w1, w2, tile_s=128)
    jax.block_until_ready(out)
    ref = channel_attention_ref(x, w1, w2)
    assert out.shape == (N, C, 1, 1)
    assert bool(jnp.all(jnp.isfinite(out)))
    assert bool(jnp.allclose(out, ref, atol=1e-4, rtol=1e-4))

    # default (VMEM-budgeted) tile selection -> single grid step
    out2 = channel_attention_pallas(x, w1, w2)
    jax.block_until_ready(out2)
    assert bool(jnp.allclose(out2, ref, atol=1e-4, rtol=1e-4))

    # --- test 2: bf16 streaming + ragged spatial (S = 196 -> masked tail tile)
    N2, C2, r2 = 2, 32, 8
    H2 = W2 = 14
    Cr2 = C2 // r2
    xb = jax.random.normal(k3, (N2, C2, H2, W2), dtype=jnp.float32)
    w1b = jax.random.normal(k1, (C2, Cr2), dtype=jnp.float32) * jnp.sqrt(2.0 / Cr2)
    w2b = jax.random.normal(k2, (Cr2, C2), dtype=jnp.float32) * jnp.sqrt(2.0 / C2)
    xb16 = xb.astype(jnp.bfloat16)

    outb = channel_attention_pallas(xb16, w1b, w2b, tile_s=128)   # grid=(2,), masked tail
    jax.block_until_ready(outb)
    refb = channel_attention_ref(xb16.astype(jnp.float32), w1b, w2b)
    outb_f32 = outb.astype(jnp.float32)
    assert bool(jnp.all(jnp.isfinite(outb_f32)))
    assert bool(jnp.allclose(outb_f32, refb, atol=1e-2, rtol=1e-2))

    print("KERNEL_OK")
</pallas_src>

<mosaic_0001>
module attributes {stable_mosaic.version = 11 : i64} {
  func.func @_channel_attention_kernel(%arg0: i32, %arg1: memref<2x16x128xf32, #tpu.memory_space<vmem>>, %arg2: memref<16x2xf32, #tpu.memory_space<vmem>>, %arg3: memref<2x16xf32, #tpu.memory_space<vmem>>, %arg4: memref<2x16xf32, #tpu.memory_space<vmem>>, %arg5: memref<2x16x128xf32, #tpu.memory_space<vmem>>, %arg6: memref<2x16x128xf32, #tpu.memory_space<vmem>>) attributes {dimension_semantics = [#tpu.dimension_semantics<arbitrary>], iteration_bounds = array<i64: 2>, scalar_prefetch = 0 : i64, scratch_operands = 2 : i64, tpu.core_type = #tpu.core_type<tc>, window_params = [{transform_indices = @transform_0, window_bounds = array<i64: 2, 16, 128>}, {pipeline_mode = #tpu.pipeline_mode<synchronous>, transform_indices = @transform_1, window_bounds = array<i64: 16, 2>}, {pipeline_mode = #tpu.pipeline_mode<synchronous>, transform_indices = @transform_2, window_bounds = array<i64: 2, 16>}, {pipeline_mode = #tpu.pipeline_mode<synchronous>, transform_indices = @transform_3, window_bounds = array<i64: 2, 16>}]} {
    %c0_i32 = arith.constant 0 : i32
    %0 = arith.cmpi eq, %arg0, %c0_i32 : i32
    %1 = arith.extui %0 : i1 to i32
    %c0_i32_0 = arith.constant 0 : i32
    %2 = arith.cmpi ne, %1, %c0_i32_0 : i32
    scf.if %2 {
      %cst_18 = arith.constant -3.40282347E+38 : f32
      %20 = vector.broadcast %cst_18 : f32 to vector<2x16x128xf32>
      %c0_19 = arith.constant 0 : index
      %c0_20 = arith.constant 0 : index
      %c0_21 = arith.constant 0 : index
      %21 = vector.load %arg5[%c0_19, %c0_20, %c0_21] : memref<2x16x128xf32, #tpu.memory_space<vmem>>, vector<2x16x128xf32>
      tpu.vector_store %arg5[%c0_19, %c0_20, %c0_21], %20 {strides = array<i32>} : memref<2x16x128xf32, #tpu.memory_space<vmem>>, vector<2x16x128xf32>,
      %cst_22 = arith.constant 0.000000e+00 : f32
      %22 = vector.broadcast %cst_22 : f32 to vector<2x16x128xf32>
      %c0_23 = arith.constant 0 : index
      %c0_24 = arith.constant 0 : index
      %c0_25 = arith.constant 0 : index
      %23 = vector.load %arg6[%c0_23, %c0_24, %c0_25] : memref<2x16x128xf32, #tpu.memory_space<vmem>>, vector<2x16x128xf32>
      tpu.vector_store %arg6[%c0_23, %c0_24, %c0_25], %22 {strides = array<i32>} : memref<2x16x128xf32, #tpu.memory_space<vmem>>, vector<2x16x128xf32>,
    } else {
    }
    %cst = arith.constant -3.40282347E+38 : f32
    %3 = vector.broadcast %cst : f32 to vector<2x16x128xf32>
    %cst_1 = arith.constant 0.000000e+00 : f32
    %4 = vector.broadcast %cst_1 : f32 to vector<2x16x128xf32>
    %c0_i32_2 = arith.constant 0 : i32
    %c128_i32 = arith.constant 128 : i32
    %5 = arith.muli %c0_i32_2, %c128_i32 : i32
    %6 = tpu.assume_multiple %5, 128 : i32
    %c0 = arith.constant 0 : index
    %c0_3 = arith.constant 0 : index
    %7 = arith.index_cast %6 : i32 to index
    %8 = vector.load %arg1[%c0, %c0_3, %7] : memref<2x16x128xf32, #tpu.memory_space<vmem>>, vector<2x16x128xf32>
    %9 = arith.maximumf %3, %8 : vector<2x16x128xf32>
    %10 = arith.addf %4, %8 : vector<2x16x128xf32>
    %c1_i32 = arith.constant 1 : i32
    %c0_4 = arith.constant 0 : index
    %c0_5 = arith.constant 0 : index
    %c0_6 = arith.constant 0 : index
    %11 = vector.load %arg5[%c0_4, %c0_5, %c0_6] : memref<2x16x128xf32, #tpu.memory_space<vmem>>, vector<2x16x128xf32>
    %12 = arith.maximumf %11, %9 : vector<2x16x128xf32>
    %c0_7 = arith.constant 0 : index
    %c0_8 = arith.constant 0 : index
    %c0_9 = arith.constant 0 : index
    %13 = vector.load %arg5[%c0_7, %c0_8, %c0_9] : memref<2x16x128xf32, #tpu.memory_space<vmem>>, vector<2x16x128xf32>
    tpu.vector_store %arg5[%c0_7, %c0_8, %c0_9], %12 {strides = array<i32>} : memref<2x16x128xf32, #tpu.memory_space<vmem>>, vector<2x16x128xf32>,
    %c0_10 = arith.constant 0 : index
    %c0_11 = arith.constant 0 : index
    %c0_12 = arith.constant 0 : index
    %14 = vector.load %arg6[%c0_10, %c0_11, %c0_12] : memref<2x16x128xf32, #tpu.memory_space<vmem>>, vector<2x16x128xf32>
    %15 = arith.addf %14, %10 : vector<2x16x128xf32>
    %c0_13 = arith.constant 0 : index
    %c0_14 = arith.constant 0 : index
    %c0_15 = arith.constant 0 : index
    %16 = vector.load %arg6[%c0_13, %c0_14, %c0_15] : memref<2x16x128xf32, #tpu.memory_space<vmem>>, vector<2x16x128xf32>
    tpu.vector_store %arg6[%c0_13, %c0_14, %c0_15], %15 {strides = array<i32>} : memref<2x16x128xf32, #tpu.memory_space<vmem>>, vector<2x16x128xf32>,
    %c1_i32_16 = arith.constant 1 : i32
    %17 = arith.cmpi eq, %arg0, %c1_i32_16 : i32
    %18 = arith.extui %17 : i1 to i32
    %c0_i32_17 = arith.constant 0 : i32
    %19 = arith.cmpi ne, %18, %c0_i32_17 : i32
    scf.if %19 {
      %c0_18 = arith.constant 0 : index
      %c0_19 = arith.constant 0 : index
      %c0_20 = arith.constant 0 : index
      %20 = vector.load %arg5[%c0_18, %c0_19, %c0_20] : memref<2x16x128xf32, #tpu.memory_space<vmem>>, vector<2x16x128xf32>
      %cst_21 = arith.constant dense<0xFF800000> : vector<2x16xf32>
      %21 = vector.multi_reduction <maximumf>, %20, %cst_21 [2] : vector<2x16x128xf32> to vector<2x16xf32>
      %c0_22 = arith.constant 0 : index
      %c0_23 = arith.constant 0 : index
      %c0_24 = arith.constant 0 : index
      %22 = vector.load %arg6[%c0_22, %c0_23, %c0_24] : memref<2x16x128xf32, #tpu.memory_space<vmem>>, vector<2x16x128xf32>
      %cst_25 = arith.constant dense<0.000000e+00> : vector<2x16xf32>
      %23 = vector.multi_reduction <add>, %22, %cst_25 [2] : vector<2x16x128xf32> to vector<2x16xf32>
      %cst_26 = arith.constant 3.906250e-03 : f32
      %24 = vector.broadcast %cst_26 : f32 to vector<2x16xf32>
      %25 = arith.mulf %23, %24 : vector<2x16xf32>
      %26 = tpu.concatenate %21, %25 in 0 : vector<2x16xf32>, vector<2x16xf32> -> vector<4x16xf32>
      %c0_27 = arith.constant 0 : index
      %c0_28 = arith.constant 0 : index
      %27 = vector.load %arg2[%c0_27, %c0_28] : memref<16x2xf32, #tpu.memory_space<vmem>>, vector<16x2xf32>
      %cst_29 = arith.constant dense<0.000000e+00> : vector<4x2xf32>
      %28 = tpu.matmul %26, %27, %cst_29 {dimension_numbers = #tpu.dot_dimension_numbers<[1], [0], [0], [1], [0, 0, 1, 1], [], []>} : vector<4x16xf32>, vector<16x2xf32>, vector<4x2xf32> -> vector<4x2xf32>
      %cst_30 = arith.constant 0.000000e+00 : f32
      %29 = vector.broadcast %cst_30 : f32 to vector<4x2xf32>
      %30 = arith.maximumf %28, %29 : vector<4x2xf32>
      %c0_31 = arith.constant 0 : index
      %c0_32 = arith.constant 0 : index
      %31 = vector.load %arg3[%c0_31, %c0_32] : memref<2x16xf32, #tpu.memory_space<vmem>>, vector<2x16xf32>
      %cst_33 = arith.constant dense<0.000000e+00> : vector<4x16xf32>
      %32 = tpu.matmul %30, %31, %cst_33 {dimension_numbers = #tpu.dot_dimension_numbers<[1], [0], [0], [1], [0, 0, 1, 1], [], []>} : vector<4x2xf32>, vector<2x16xf32>, vector<4x16xf32> -> vector<4x16xf32>
      %33 = vector.extract_strided_slice %32 {offsets = [0, 0], sizes = [2, 16], strides = [1, 1]} : vector<4x16xf32> to vector<2x16xf32>
      %34 = vector.extract_strided_slice %32 {offsets = [2, 0], sizes = [2, 16], strides = [1, 1]} : vector<4x16xf32> to vector<2x16xf32>
      %35 = arith.addf %33, %34 : vector<2x16xf32>
      %cst_34 = arith.constant 5.000000e-01 : f32
      %36 = vector.broadcast %cst_34 : f32 to vector<2x16xf32>
      %37 = arith.mulf %36, %35 : vector<2x16xf32>
      %38 = math.tanh %37 : vector<2x16xf32>
      %cst_35 = arith.constant 1.000000e+00 : f32
      %39 = vector.broadcast %cst_35 : f32 to vector<2x16xf32>
      %40 = arith.addf %38, %39 : vector<2x16xf32>
      %cst_36 = arith.constant 5.000000e-01 : f32
      %41 = vector.broadcast %cst_36 : f32 to vector<2x16xf32>
      %42 = arith.mulf %41, %40 : vector<2x16xf32>
      %c0_37 = arith.constant 0 : index
      %c0_38 = arith.constant 0 : index
      %43 = vector.load %arg4[%c0_37, %c0_38] : memref<2x16xf32, #tpu.memory_space<vmem>>, vector<2x16xf32>
      tpu.vector_store %arg4[%c0_37, %c0_38], %42 {strides = array<i32>} : memref<2x16xf32, #tpu.memory_space<vmem>>, vector<2x16xf32>,
    } else {
    }
    return
  }
  func.func @transform_0(%arg0: i32) -> (i32, i32, i32) {
    %c0_i32 = arith.constant 0 : i32
    %c0_i32_0 = arith.constant 0 : i32
    %c0_i32_1 = arith.constant 0 : i32
    return %c0_i32, %c0_i32_0, %arg0 : i32, i32, i32
  }
  func.func @transform_1(%arg0: i32) -> (i32, i32) {
    %c0_i32 = arith.constant 0 : i32
    %c0_i32_0 = arith.constant 0 : i32
    %c0_i32_1 = arith.constant 0 : i32
    return %c0_i32, %c0_i32_0 : i32, i32
  }
  func.func @transform_2(%arg0: i32) -> (i32, i32) {
    %c0_i32 = arith.constant 0 : i32
    %c0_i32_0 = arith.constant 0 : i32
    %c0_i32_1 = arith.constant 0 : i32
    return %c0_i32, %c0_i32_0 : i32, i32
  }
  func.func @transform_3(%arg0: i32) -> (i32, i32) {
    %c0_i32 = arith.constant 0 : i32
    %c0_i32_0 = arith.constant 0 : i32
    %c0_i32_1 = arith.constant 0 : i32
    return %c0_i32, %c0_i32_0 : i32, i32
  }
}

</mosaic_0001>

<llo_original>
// kernel: tpu_custom_call.1
$region0: #{tpu_custom_call.1}
  #allocation0 [shape = 'u32[]', space=smem, size = 0x4, offset = 0x4, fixed_abs, tag = 'smem constant byte address 0x4 - core index']
  #allocation1 [shape = 'u32[144,128]{1,0:T(1,128)}', space=vmem, size = 0x12000, scoped, tag = 'internal scratch']
  #allocation2 [shape = 'f32[2,16,128]{2,1,0:T(8,128)}', space=vmem, size = 0x4000, scoped, tag = 'scratch operand']
  #allocation3 [shape = 'f32[2,16,128]{2,1,0:T(8,128)}', space=vmem, size = 0x4000, scoped, tag = 'scratch operand']
  %s0 = inlined_call_operand.hbm [shape: f32[2,16,256], index: 0, kind: input, shape index: {}]
  %s1 = inlined_call_operand.vmem [shape: f32[16,2], index: 1, kind: input, shape index: {}]
  %s2 = inlined_call_operand.vmem [shape: f32[2,16], index: 2, kind: input, shape index: {}]
  %s3 = inlined_call_operand.hbm [shape: f32[2,16], index: 3, kind: output, shape index: {}]
  %s4 = sld [smem:[#allocation0]]
  $region57: #{tpu_custom_call.1} parent=0
    _
  %s6 = ssub.s32 1, %s4
  %s7 = scalar_select 0, %s6, %s4
  $region1: #{tpu_custom_call.1} parent=0
    #allocation4 [shape = 'u8[32768]{0}', space=vmem, size = 0x8000, scoped, tag = 'input window, operand 0']
    #allocation5 [shape = 's32[2]{0}', space=sflag, size = 0x8, scoped, tag = 'scoped memory for tpu_custom_call.1']
    #allocation6 [shape = 's32[2]{0}', space=sflag, size = 0x8, scoped, tag = 'scoped memory for tpu_custom_call.1']
    #allocation7 [shape = 'u8[1024]{0}', space=vmem, size = 0x400, scoped, tag = 'output window, operand 0, single buffered']
    %8 = vsyncpa [#allocation5], 0
    %s9 = scalar_lea.sflag [#allocation5], 1
    %10 = vsyncpa %s9, 0
    %11 = vsyncpa [#allocation6], 0
    loop: start=0, step=1, limit=4
    $region2: #{tpu_custom_call.1} parent=1 // loop_pre_header
      _
    $region3: #{tpu_custom_call.1} parent=1 // loop_header
      %s13 = sphi 0, %s17
      %p14 = scmp.ge.s32.totalorder %s13, 4
      %s23 = sphi 0, %s25
      %s26 = sphi 0, %s23
      %s27 = sphi 0, %s26
      %s43 = sphi 0, %s27
      %s47 = sphi 0, %s47
      %s49 = sphi 0, %s47
      %s50 = sphi 0, %s49
      %s64 = sphi 0, %s50
      %s68 = sphi 0, %s68
      %s70 = sphi 0, %s68
      %s71 = sphi 0, %s70
      %s85 = sphi 0, %s71
      %s89 = sphi 0, %s89
      %s91 = sphi 0, %s89
      %s92 = sphi 0, %s91
      %s106 = sphi 0, %s92
    $region4: #{tpu_custom_call.1} parent=1 // loop_header_branch
      %16 = sbr.rel (%p14) target = $region8
    $region5: #{tpu_custom_call.1} parent=1 // loop_body
      %s18 = ssub.s32 %s13, 1
      %s19 = ssub.s32 %s13, 2
      %s20 = sadd.s32 %s13, 1
      %s21 = ssub.s32 %s13, %s20
      %p22 = scmp.eq.s32.totalorder %s21, 0
      %s24 = sadd.s32 %s23, 1
      %s25 = scalar_select %p22, %s23, %s24
      %p28 = pneg %p22
      %p29 = scmp.eq.s32.totalorder %s13, 1
      %p30 = por %p28, %p29
      %p31 = scmp.ne.s32.totalorder %s23, %s26
      %p32 = scmp.eq.s32.totalorder %s13, 0
      %p33 = por %p31, %p32
      %p34 = scmp.ne.s32.totalorder %s23, %s26
      %p35 = scmp.eq.s32.totalorder %s18, 1
      %p36 = por %p34, %p35
      %p37 = scmp.ne.s32.totalorder %s26, %s27
      %p38 = scmp.eq.s32.totalorder %s18, 0
      %p39 = por %p37, %p38
      %p40 = scmp.ne.s32.totalorder %s26, %s27
      %p41 = scmp.eq.s32.totalorder %s19, 1
      %p42 = por %p40, %p41
      %p44 = scmp.ne.s32.totalorder %s27, %s43
      %p45 = scmp.eq.s32.totalorder %s19, 0
      %p46 = por %p44, %p45
      %s48 = sadd.s32 %s47, 1
      %p51 = scmp.eq.s32.totalorder %s13, 1
      %p52 = scmp.ne.s32.totalorder %s47, %s49
      %p53 = scmp.eq.s32.totalorder %s13, 0
      %p54 = por %p52, %p53
      %p55 = scmp.ne.s32.totalorder %s47, %s49
      %p56 = scmp.eq.s32.totalorder %s18, 1
      %p57 = por %p55, %p56
      %p58 = scmp.ne.s32.totalorder %s49, %s50
      %p59 = scmp.eq.s32.totalorder %s18, 0
      %p60 = por %p58, %p59
      %p61 = scmp.ne.s32.totalorder %s49, %s50
      %p62 = scmp.eq.s32.totalorder %s19, 1
      %p63 = por %p61, %p62
      %p65 = scmp.ne.s32.totalorder %s50, %s64
      %p66 = scmp.eq.s32.totalorder %s19, 0
      %p67 = por %p65, %p66
      %s69 = sadd.s32 %s68, 1
      %p72 = scmp.eq.s32.totalorder %s13, 1
      %p73 = scmp.ne.s32.totalorder %s68, %s70
      %p74 = scmp.eq.s32.totalorder %s13, 0
      %p75 = por %p73, %p74
      %p76 = scmp.ne.s32.totalorder %s68, %s70
      %p77 = scmp.eq.s32.totalorder %s18, 1
      %p78 = por %p76, %p77
      %p79 = scmp.ne.s32.totalorder %s70, %s71
      %p80 = scmp.eq.s32.totalorder %s18, 0
      %p81 = por %p79, %p80
      %p82 = scmp.ne.s32.totalorder %s70, %s71
      %p83 = scmp.eq.s32.totalorder %s19, 1
      %p84 = por %p82, %p83
      %p86 = scmp.ne.s32.totalorder %s71, %s85
      %p87 = scmp.eq.s32.totalorder %s19, 0
      %p88 = por %p86, %p87
      %s90 = sadd.s32 %s89, 1
      %p93 = scmp.eq.s32.totalorder %s13, 1
      %p94 = scmp.ne.s32.totalorder %s89, %s91
      %p95 = scmp.eq.s32.totalorder %s13, 0
      %p96 = por %p94, %p95
      %p97 = scmp.ne.s32.totalorder %s89, %s91
      %p98 = scmp.eq.s32.totalorder %s18, 1
      %p99 = por %p97, %p98
      %p100 = scmp.ne.s32.totalorder %s91, %s92
      %p101 = scmp.eq.s32.totalorder %s18, 0
      %p102 = por %p100, %p101
      %p103 = scmp.ne.s32.totalorder %s91, %s92
      %p104 = scmp.eq.s32.totalorder %s19, 1
      %p105 = por %p103, %p104
      %p107 = scmp.ne.s32.totalorder %s92, %s106
      %p108 = scmp.eq.s32.totalorder %s19, 0
      %p109 = por %p107, %p108
      %p110 = scmp.le.s32.totalorder 1, %s13
      %p111 = scmp.lt.s32.totalorder %s13, 3
      %p112 = pnand %p110, %p111
      %p113 = pneg %p112
      // Predicated region
      $region9: #{tpu_custom_call.1} parent=5 // pred_check
        _
      $region10: #{tpu_custom_call.1} parent=5 // pred_check_branch
        %115 = sbr.rel (%p112) target = $region12
      $region11: #{tpu_custom_call.1} parent=5 // pred_region
        %s116 = ssub.s32 %s13, 1
        // Predicated region
        $region13: #{tpu_custom_call.1} parent=11 // pred_check
          %p117 = pneg %p60
        $region14: #{tpu_custom_call.1} parent=11 // pred_check_branch
          %119 = sbr.rel (%p117) target = $region16
        $region15: #{tpu_custom_call.1} parent=11 // pred_region
          _
        $region16: #{tpu_custom_call.1} parent=11 // pred_fallthru
          _
        // Predicated region
        $region17: #{tpu_custom_call.1} parent=11 // pred_check
          %p120 = pneg %p81
        $region18: #{tpu_custom_call.1} parent=11 // pred_check_branch
          %122 = sbr.rel (%p120) target = $region20
        $region19: #{tpu_custom_call.1} parent=11 // pred_region
          _
        $region20: #{tpu_custom_call.1} parent=11 // pred_fallthru
          _
      $region12: #{tpu_custom_call.1} parent=5 // pred_fallthru
        _
      %p123 = scmp.lt.s32.totalorder %s13, 2
      // Predicated region
      $region21: #{tpu_custom_call.1} parent=5 // pred_check
        %p124 = pneg %p123
      $region22: #{tpu_custom_call.1} parent=5 // pred_check_branch
        %126 = sbr.rel (%p124) target = $region24
      $region23: #{tpu_custom_call.1} parent=5 // pred_region
        // Predicated region
        $region25: #{tpu_custom_call.1} parent=23 // pred_check
          %p127 = pneg %p33
        $region26: #{tpu_custom_call.1} parent=23 // pred_check_branch
          %129 = sbr.rel (%p127) target = $region28
        $region27: #{tpu_custom_call.1} parent=23 // pred_region
          %s130 = sand.u32 %s23, 1
          %s131 = scalar_lea.sflag [#allocation5], %s130
          %s132 = sand.u32 %s23, 1
          %s133 = smul.addr %s132, 32
          %s134 = scalar_lea.vmem [#allocation4], %s133
          %s136 = ssub.s32 512, 512
          %137 = vsyncadd %s131, %s136
          %s138 = smul.addr %s13, 128
          %s139 = scalar_lea.hbm %s0, %s138
          %s140 = sshll.u32 %s134, 4
          %s141 = int_to_ptr.vmem [resolvable:$true] %s140
          %146 = dma.hbm_to_vmem [thread:$0]  %s139, 512, %s141, %s131, 256, 128, 8
        $region28: #{tpu_custom_call.1} parent=23 // pred_fallthru
          _
      $region24: #{tpu_custom_call.1} parent=5 // pred_fallthru
        _
      %p147 = scmp.le.s32.totalorder 1, %s13
      %p148 = scmp.lt.s32.totalorder %s13, 3
      %p149 = pnand %p147, %p148
      %p150 = pneg %p149
      // Predicated region
      $region29: #{tpu_custom_call.1} parent=5 // pred_check
        _
      $region30: #{tpu_custom_call.1} parent=5 // pred_check_branch
        %152 = sbr.rel (%p149) target = $region32
      $region31: #{tpu_custom_call.1} parent=5 // pred_region
        %s153 = ssub.s32 %s13, 1
        %s154 = sand.u32 %s26, 1
        %s155 = scalar_lea.sflag [#allocation5], %s154
        %s156 = sand.u32 %s26, 1
        %s157 = smul.addr %s156, 32
        %s158 = scalar_lea.vmem [#allocation4], %s157
        // Predicated region
        $region33: #{tpu_custom_call.1} parent=31 // pred_check
          %p159 = pneg %p39
        $region34: #{tpu_custom_call.1} parent=31 // pred_check_branch
          %161 = sbr.rel (%p159) target = $region36
        $region35: #{tpu_custom_call.1} parent=31 // pred_region
          %162 = dma.done %s155, 512
        $region36: #{tpu_custom_call.1} parent=31 // pred_fallthru
          _
        %s163 = sand.u32 %s26, 1
        %s164 = scalar_lea.sflag [#allocation5], %s163
        %s165 = sand.u32 %s26, 1
        %s166 = smul.addr %s165, 32
        %s167 = scalar_lea.vmem [#allocation4], %s166
        %p168 = pneg %p39
        %p169 = pneg %p36
        %p170 = pneg %p60
        %p171 = pneg %p57
        %p172 = pneg %p81
        %p173 = pneg %p78
        %p174 = pneg %p102
        %p175 = pneg %p99
        %p176 = scmp.eq.s32.totalorder %s18, 0
        // Predicated region
        $region37: #{tpu_custom_call.1} parent=31 // pred_check
          %p177 = pneg %p176
        $region38: #{tpu_custom_call.1} parent=31 // pred_check_branch
          %179 = sbr.rel (%p177) target = $region40
        $region39: #{tpu_custom_call.1} parent=31 // pred_region
          %180 = vst [vmem:[#allocation2] sm:$0xff] -3.4028235e+38
          %181 = vst [vmem:[#allocation2 + $0x8] sm:$0xff] -3.4028235e+38
          %182 = vst [vmem:[#allocation2 + $0x10] sm:$0xff] -3.4028235e+38
          %183 = vst [vmem:[#allocation2 + $0x18] sm:$0xff] -3.4028235e+38
          %184 = vst [vmem:[#allocation3] sm:$0xff] 0.0
          %185 = vst [vmem:[#allocation3 + $0x8] sm:$0xff] 0.0
          %186 = vst [vmem:[#allocation3 + $0x10] sm:$0xff] 0.0
          %187 = vst [vmem:[#allocation3 + $0x18] sm:$0xff] 0.0
        $region40: #{tpu_custom_call.1} parent=31 // pred_fallthru
          _
        %v188 = vld [vmem:[%s158] sm:$0xff]
        %v189 = vld [vmem:[%s158 + $0x8] sm:$0xff]
        %v190 = vld [vmem:[%s158 + $0x10] sm:$0xff]
        %v191 = vld [vmem:[%s158 + $0x18] sm:$0xff]
        %v192 = vmax.f32 %v188, -3.4028235e+38
        %v193 = vmax.f32 %v189, -3.4028235e+38
        %v194 = vmax.f32 %v190, -3.4028235e+38
        %v195 = vmax.f32 %v191, -3.4028235e+38
        %v196 = vadd.f32 %v188, 0.0
        %v197 = vadd.f32 %v189, 0.0
        %v198 = vadd.f32 %v190, 0.0
        %v199 = vadd.f32 %v191, 0.0
        %v200 = vld [vmem:[#allocation2] sm:$0xff]
        %v201 = vld [vmem:[#allocation2 + $0x8] sm:$0xff]
        %v202 = vld [vmem:[#allocation2 + $0x10] sm:$0xff]
        %v203 = vld [vmem:[#allocation2 + $0x18] sm:$0xff]
        %v204 = vmax.f32 %v200, %v192
        %v205 = vmax.f32 %v201, %v193
        %v206 = vmax.f32 %v202, %v194
        %v207 = vmax.f32 %v203, %v195
        %208 = vst [vmem:[#allocation2] sm:$0xff] %v204
        %209 = vst [vmem:[#allocation2 + $0x8] sm:$0xff] %v205
        %210 = vst [vmem:[#allocation2 + $0x10] sm:$0xff] %v206
        %211 = vst [vmem:[#allocation2 + $0x18] sm:$0xff] %v207
        %v212 = vld [vmem:[#allocation3] sm:$0xff]
        %v213 = vld [vmem:[#allocation3 + $0x8] sm:$0xff]
        %v214 = vld [vmem:[#allocation3 + $0x10] sm:$0xff]
        %v215 = vld [vmem:[#allocation3 + $0x18] sm:$0xff]
        %v216 = vadd.f32 %v212, %v196
        %v217 = vadd.f32 %v213, %v197
        %v218 = vadd.f32 %v214, %v198
        %v219 = vadd.f32 %v215, %v199
        %220 = vst [vmem:[#allocation3] sm:$0xff] %v216
        %221 = vst [vmem:[#allocation3 + $0x8] sm:$0xff] %v217
        %222 = vst [vmem:[#allocation3 + $0x10] sm:$0xff] %v218
        %223 = vst [vmem:[#allocation3 + $0x18] sm:$0xff] %v219
        %p224 = scmp.eq.s32.totalorder %s18, 1
        // Predicated region
        $region41: #{tpu_custom_call.1} parent=31 // pred_check
          %p225 = pneg %p224
        $region42: #{tpu_custom_call.1} parent=31 // pred_check_branch
          %227 = sbr.rel (%p225) target = $region44
        $region43: #{tpu_custom_call.1} parent=31 // pred_region
          %v228 = vld [vmem:[#allocation2] sm:$0xff]
          %v229 = vld [vmem:[#allocation2 + $0x8] sm:$0xff]
          %v230 = vld [vmem:[#allocation2 + $0x10] sm:$0xff]
          %v231 = vld [vmem:[#allocation2 + $0x18] sm:$0xff]
          %232 = vmax.xlane.f32.xlu0 %v228
          %v233 = vpop.xlane.xlu0 %232
          %234 = vmax.xlane.f32.xlu0 %v229
          %v235 = vpop.xlane.xlu0 %234
          %236 = vmax.xlane.f32.xlu0 %v230
          %v237 = vpop.xlane.xlu0 %236
          %238 = vmax.xlane.f32.xlu0 %v231
          %v239 = vpop.xlane.xlu0 %238
          %v240 = vld [vmem:[#allocation3] sm:$0xff]
          %v241 = vld [vmem:[#allocation3 + $0x8] sm:$0xff]
          %v242 = vld [vmem:[#allocation3 + $0x10] sm:$0xff]
          %v243 = vld [vmem:[#allocation3 + $0x18] sm:$0xff]
          %244 = vadd.xlane.f32.xlu0 %v240
          %v245 = vpop.xlane.xlu0 %244
          %246 = vadd.xlane.f32.xlu0 %v241
          %v247 = vpop.xlane.xlu0 %246
          %248 = vadd.xlane.f32.xlu0 %v242
          %v249 = vpop.xlane.xlu0 %248
          %250 = vadd.xlane.f32.xlu0 %v243
          %v251 = vpop.xlane.xlu0 %250
          %v252 = vmul.f32 %v245, 0.00390625
          %v253 = vmul.f32 %v247, 0.00390625
          %v254 = vmul.f32 %v249, 0.00390625
          %v255 = vmul.f32 %v251, 0.00390625
          %v260 = vlaneseq
          %v261 = vand.u32 %v260, 127
          %v262 = vlaneseq
          %v263 = vshrl.u32 %v262, 7
          %v264 = vsub.s32 %v261, %v263
          %v265 = vrot.slane %v233, %v264
          %v266 = vadd.s32 %v261, 4294967288
          %v267 = vlaneseq
          %v268 = vshrl.u32 %v267, 7
          %v269 = vsub.s32 %v266, %v268
          %v270 = vrot.slane %v235, %v269
          %vm271 = vcmask 130112
          %v272 = vsel %vm271, %v270, %v265
          %v273 = vlaneseq
          %v274 = vshrl.u32 %v273, 7
          %v275 = vsub.s32 %v261, %v274
          %v276 = vrot.slane %v237, %v275
          %v277 = vlaneseq
          %v278 = vshrl.u32 %v277, 7
          %v279 = vsub.s32 %v266, %v278
          %v280 = vrot.slane %v239, %v279
          %v281 = vsel %vm271, %v280, %v276
          %vm282 = vcmask 1041409
          %v283 = vsel %vm282, %v281, %v272
          %v289 = vlaneseq
          %v290 = vshrl.u32 %v289, 7
          %v291 = vsub.s32 %v261, %v290
          %v292 = vrot.slane %v252, %v291
          %v293 = vlaneseq
          %v294 = vshrl.u32 %v293, 7
          %v295 = vsub.s32 %v266, %v294
          %v296 = vrot.slane %v253, %v295
          %v297 = vsel %vm271, %v296, %v292
          %v298 = vlaneseq
          %v299 = vshrl.u32 %v298, 7
          %v300 = vsub.s32 %v261, %v299
          %v301 = vrot.slane %v254, %v300
          %v302 = vlaneseq
          %v303 = vshrl.u32 %v302, 7
          %v304 = vsub.s32 %v266, %v303
          %v305 = vrot.slane %v255, %v304
          %v306 = vsel %vm271, %v305, %v301
          %vm307 = vcmask 1043459
          %v308 = vsel %vm307, %v306, %v297
          %vm310 = vcmask 1041408
          %v311 = vsel %vm310, %v283, %v308
          %v312 = vld [vmem:[%s1] sm:$0xff]
          %v313 = vld [vmem:[%s1 + $0x8] sm:$0xff]
          %vm314 = vcmask 130048
          %v316 = vsel %vm314, %v311, 0
          %318 = vmatprep.subr.mxu0 0.0
          %319 = vmatpush1.msra.mxu0 %v312
          %320 = vmatprep.subr.mxu0 0.0
          %321 = vmatpush1.msra.mxu0 %v313
          %322 = vmatprep.subr.mxu0 0.0
          %323 = vmatpush1.msra.mxu0 0.0
          %324 = vmatprep.subr.mxu0 0.0
          %325 = vmatpush1.msra.mxu0 0.0
          %326 = vmatprep.subr.mxu0 0.0
          %327 = vmatpush1.msra.mxu0 0.0
          %328 = vmatprep.subr.mxu0 0.0
          %329 = vmatpush1.msra.mxu0 0.0
          %330 = vmatprep.subr.mxu0 0.0
          %331 = vmatpush1.msra.mxu0 0.0
          %332 = vmatprep.subr.mxu0 0.0
          %333 = vmatpush1.msra.mxu0 0.0
          %334 = vmatprep.subr.mxu0 0.0
          %335 = vmatpush1.msra.mxu0 0.0
          %336 = vmatprep.subr.mxu0 0.0
          %337 = vmatpush1.msra.mxu0 0.0
          %338 = vmatprep.subr.mxu0 0.0
          %339 = vmatpush1.msra.mxu0 0.0
          %340 = vmatprep.subr.mxu0 0.0
          %341 = vmatpush1.msra.mxu0 0.0
          %342 = vmatprep.subr.mxu0 0.0
          %343 = vmatpush1.msra.mxu0 0.0
          %344 = vmatprep.subr.mxu0 0.0
          %345 = vmatpush1.msra.mxu0 0.0
          %346 = vmatprep.subr.mxu0 0.0
          %347 = vmatpush1.msra.mxu0 0.0
          %348 = vmatprep.subr.mxu0 0.0
          %349 = vmatpush1.msra.mxu0 0.0
          %350 = vmatprep.subr.mxu0 0.0
          %351 = vmatpush1.msra.mxu0 0.0
          %352 = vmatprep.subr.mxu0 0.0
          %353 = vmatpush1.msra.mxu0 0.0
          %354 = vmatprep.subr.mxu0 0.0
          %355 = vmatpush1.msra.mxu0 0.0
          %356 = vmatprep.subr.mxu0 0.0
          %357 = vmatpush1.msra.mxu0 0.0
          %358 = vmatprep.subr.mxu0 0.0
          %359 = vmatpush1.msra.mxu0 0.0
          %360 = vmatprep.subr.mxu0 0.0
          %361 = vmatpush1.msra.mxu0 0.0
          %362 = vmatprep.subr.mxu0 0.0
          %363 = vmatpush1.msra.mxu0 0.0
          %364 = vmatprep.subr.mxu0 0.0
          %365 = vmatpush1.msra.mxu0 0.0
          %366 = vmatprep.subr.mxu0 0.0
          %367 = vmatpush1.msra.mxu0 0.0
          %368 = vmatprep.subr.mxu0 0.0
          %369 = vmatpush1.msra.mxu0 0.0
          %370 = vmatprep.subr.mxu0 0.0
          %371 = vmatpush1.msra.mxu0 0.0
          %372 = vmatprep.subr.mxu0 0.0
          %373 = vmatpush1.msra.mxu0 0.0
          %374 = vmatprep.subr.mxu0 0.0
          %375 = vmatpush1.msra.mxu0 0.0
          %376 = vmatprep.subr.mxu0 0.0
          %377 = vmatpush1.msra.mxu0 0.0
          %378 = vmatprep.subr.mxu0 0.0
          %379 = vmatpush1.msra.mxu0 0.0
          %380 = vmatprep.subr.mxu0 0.0
          %381 = vmatpush1.msra.mxu0 0.0
          %382 = vmatprep.mubr.f32.mxu0 0.0
          %383 = vmatmul.mubr.f32.gmra.mrb[0].mxu0 %v316
          %v384 = vpop.f32.mrb[0].mxu0
          %v385 = vadd.f32 0.0, %v384
          %v386 = vpop.f32.mrb[0].mxu0
          %387 = vdwg.mxu0
          %v388 = vmax.f32 %v385, 0.0
          %v389 = vld [vmem:[%s2] sm:$0x3]
          %vm390 = vcmask 15360
          %v392 = vsel %vm390, %v388, 0
          %v395 = vsel %vm310, %v389, 0
          %397 = vmatprep.subr.mxu0 0.0
          %398 = vmatpush1.msra.mxu0 %v395
          %399 = vmatprep.subr.mxu0 0.0
          %400 = vmatpush1.msra.mxu0 0.0
          %401 = vmatprep.subr.mxu0 0.0
          %402 = vmatpush1.msra.mxu0 0.0
          %403 = vmatprep.subr.mxu0 0.0
          %404 = vmatpush1.msra.mxu0 0.0
          %405 = vmatprep.subr.mxu0 0.0
          %406 = vmatpush1.msra.mxu0 0.0
          %407 = vmatprep.subr.mxu0 0.0
          %408 = vmatpush1.msra.mxu0 0.0
          %409 = vmatprep.subr.mxu0 0.0
          %410 = vmatpush1.msra.mxu0 0.0
          %411 = vmatprep.subr.mxu0 0.0
          %412 = vmatpush1.msra.mxu0 0.0
          %413 = vmatprep.subr.mxu0 0.0
          %414 = vmatpush1.msra.mxu0 0.0
          %415 = vmatprep.subr.mxu0 0.0
          %416 = vmatpush1.msra.mxu0 0.0
          %417 = vmatprep.subr.mxu0 0.0
          %418 = vmatpush1.msra.mxu0 0.0
          %419 = vmatprep.subr.mxu0 0.0
          %420 = vmatpush1.msra.mxu0 0.0
          %421 = vmatprep.subr.mxu0 0.0
          %422 = vmatpush1.msra.mxu0 0.0
          %423 = vmatprep.subr.mxu0 0.0
          %424 = vmatpush1.msra.mxu0 0.0
          %425 = vmatprep.subr.mxu0 0.0
          %426 = vmatpush1.msra.mxu0 0.0
          %427 = vmatprep.subr.mxu0 0.0
          %428 = vmatpush1.msra.mxu0 0.0
          %429 = vmatprep.subr.mxu0 0.0
          %430 = vmatpush1.msra.mxu0 0.0
          %431 = vmatprep.subr.mxu0 0.0
          %432 = vmatpush1.msra.mxu0 0.0
          %433 = vmatprep.subr.mxu0 0.0
          %434 = vmatpush1.msra.mxu0 0.0
          %435 = vmatprep.subr.mxu0 0.0
          %436 = vmatpush1.msra.mxu0 0.0
          %437 = vmatprep.subr.mxu0 0.0
          %438 = vmatpush1.msra.mxu0 0.0
          %439 = vmatprep.subr.mxu0 0.0
          %440 = vmatpush1.msra.mxu0 0.0
          %441 = vmatprep.subr.mxu0 0.0
          %442 = vmatpush1.msra.mxu0 0.0
          %443 = vmatprep.subr.mxu0 0.0
          %444 = vmatpush1.msra.mxu0 0.0
          %445 = vmatprep.subr.mxu0 0.0
          %446 = vmatpush1.msra.mxu0 0.0
          %447 = vmatprep.subr.mxu0 0.0
          %448 = vmatpush1.msra.mxu0 0.0
          %449 = vmatprep.subr.mxu0 0.0
          %450 = vmatpush1.msra.mxu0 0.0
          %451 = vmatprep.subr.mxu0 0.0
          %452 = vmatpush1.msra.mxu0 0.0
          %453 = vmatprep.subr.mxu0 0.0
          %454 = vmatpush1.msra.mxu0 0.0
          %455 = vmatprep.subr.mxu0 0.0
          %456 = vmatpush1.msra.mxu0 0.0
          %457 = vmatprep.subr.mxu0 0.0
          %458 = vmatpush1.msra.mxu0 0.0
          %459 = vmatprep.subr.mxu0 0.0
          %460 = vmatpush1.msra.mxu0 0.0
          %461 = vmatprep.mubr.f32.mxu0 0.0
          %462 = vmatmul.mubr.f32.gmra.mrb[0].mxu0 %v392
          %v463 = vpop.f32.mrb[0].mxu0
          %v464 = vadd.f32 0.0, %v463
          %v465 = vpop.f32.mrb[0].mxu0
          %466 = vdwg.mxu0
          %v468 = vrot.slane %v464, 2
          %v470 = vadd.f32 %v464, %v468
          %v471 = vmul.f32 %v470, 0.5
          %v472 = vtanh.pop %v471
          %v473 = vadd.f32 %v472, 1.0
          %v474 = vmul.f32 %v473, 0.5
          %vm475 = vcmask 123904
          %476 = vst.msk [vmem:[#allocation7] sm:$0x3] %vm475, %v474
        $region44: #{tpu_custom_call.1} parent=31 // pred_fallthru
          _
        // Predicated region
        $region45: #{tpu_custom_call.1} parent=31 // pred_check
          %p477 = pneg %p99
        $region46: #{tpu_custom_call.1} parent=31 // pred_check_branch
          %479 = sbr.rel (%p477) target = $region48
        $region47: #{tpu_custom_call.1} parent=31 // pred_region
          %s481 = ssub.s32 32, 32
          %482 = vsyncadd [#allocation6], %s481
          %s484 = sshll.u32 [#allocation7], 4
          %s485 = int_to_ptr.vmem [resolvable:$true] %s484
          %487 = dma.vmem_to_hbm [thread:$0]  %s485, 32, %s3, [#allocation6]
        $region48: #{tpu_custom_call.1} parent=31 // pred_fallthru
          _
        // Predicated region
        $region49: #{tpu_custom_call.1} parent=31 // pred_check
          %p488 = pneg %p99
        $region50: #{tpu_custom_call.1} parent=31 // pred_check_branch
          %490 = sbr.rel (%p488) target = $region52
        $region51: #{tpu_custom_call.1} parent=31 // pred_region
          %491 = dma.done [#allocation6], 32
        $region52: #{tpu_custom_call.1} parent=31 // pred_fallthru
          _
      $region32: #{tpu_custom_call.1} parent=5 // pred_fallthru
        _
      %p492 = scmp.le.s32.totalorder 2, %s13
      // Predicated region
      $region53: #{tpu_custom_call.1} parent=5 // pred_check
        %p493 = pneg %p492
      $region54: #{tpu_custom_call.1} parent=5 // pred_check_branch
        %495 = sbr.rel (%p493) target = $region56
      $region55: #{tpu_custom_call.1} parent=5 // pred_region
        %s496 = ssub.s32 %s13, 2
      $region56: #{tpu_custom_call.1} parent=5 // pred_fallthru
        _
    $region6: #{tpu_custom_call.1} parent=1 // loop_footer
      %s17 = sadd.s32 1, %s13
    $region7: #{tpu_custom_call.1} parent=1 // loop_footer_branch
      %12 = sbr.rel target = $region3
    $region8: #{tpu_custom_call.1} parent=1 // loop_exit
      _
    %497 = vsyncpa [#allocation5], 1
    %s498 = scalar_lea.sflag [#allocation5], 1
    %499 = vsyncpa %s498, 1
    %500 = vsyncpa [#allocation6], 1
    %s501 = scalar_lea.sflag [#allocation6], 1
    %502 = vsyncpa %s501, 1

</llo_original>
